<compile_context>
chip_gen: v7x
topology: tpu7x:2x2x1
jax: 0.10.0
libtpu: 0.0.40
codegen_flags: <defaults>
</compile_context>

<pallas_src>
import math

import jax
import jax.numpy as jnp
from jax.experimental import pallas as pl
from jax.experimental.pallas import tpu as pltpu


def ae_forward_kernel(x_ref, w_enc_ref, b_enc_ref, w_dec_ref, b_dec_ref, out_ref):
    # Encoder: Linear + ReLU. Cast matmul operands to the weight dtype (f32 by
    # default, bf16 if the caller opted in); accumulate in f32 on the MXU.
    x = x_ref[...].astype(w_enc_ref.dtype)
    h = jnp.dot(x, w_enc_ref[...], preferred_element_type=jnp.float32)
    h = jnp.maximum(h + b_enc_ref[...], 0.0)

    # Decoder: Linear + Sigmoid (sigmoid -> EUP, free slot vs. the MXU path).
    logits = jnp.dot(h.astype(w_dec_ref.dtype), w_dec_ref[...],
                     preferred_element_type=jnp.float32)
    out_ref[...] = jax.nn.sigmoid(logits + b_dec_ref[...]).astype(out_ref.dtype)


def autoencoder_forward(x, params, *, tile_b=512, matmul_dtype=jnp.float32):
    """Fused autoencoder forward.

    x:      (B, n_vis) float32
    params: (w_enc (n_vis, n_hid), b_enc (1, n_hid),
             w_dec (n_hid, n_vis), b_dec (1, n_vis))
    tile_b: batch tile size (rounded to a multiple of 8 sublanes; the feature
            axis is never split so output stores stay lane-dense).
    matmul_dtype: jnp.bfloat16 on v6e / v7x for peak MXU throughput
            (f32 accumulation kept regardless).
    """
    w_enc, b_enc, w_dec, b_dec = params
    B, n_vis = x.shape
    n_hid = w_enc.shape[1]

    # Cast matmul weights once at the boundary (halves their VMEM footprint if
    # bf16 is requested). Biases stay f32: bias add / activations are f32.
    w_enc = w_enc.astype(matmul_dtype)
    w_dec = w_dec.astype(matmul_dtype)

    # Batch tile: multiple of 8 sublanes, no larger than B (rounded up).
    tb = max(8, min(int(tile_b), B))
    tb = ((tb + 7) // 8) * 8
    padded_b = ((B + tb - 1) // tb) * tb
    if padded_b != B:
        x = jnp.pad(x, ((0, padded_b - B), (0, 0)))
    grid = (padded_b // tb,)

    itemsize = jnp.dtype(jnp.float32).itemsize
    cost = pl.CostEstimate(
        flops=2 * padded_b * n_vis * n_hid * 2,          # two matmuls
        transcendentals=padded_b * n_vis,                # sigmoid
        bytes_accessed=(padded_b * n_vis * 2 * itemsize  # x + out
                        + 2 * n_vis * n_hid * jnp.dtype(matmul_dtype).itemsize
                        + (n_vis + n_hid) * itemsize),   # biases
    )

    out = pl.pallas_call(
        ae_forward_kernel,
        out_shape=jax.ShapeDtypeStruct((padded_b, n_vis), jnp.float32),
        grid=grid,
        in_specs=[
            # Only the batch axis is tiled; full feature axis per block.
            pl.BlockSpec((tb, n_vis), lambda i: (i, 0)),        # x
            # Weights / biases: constant block index -> VMEM-resident.
            pl.BlockSpec((n_vis, n_hid), lambda i: (0, 0)),     # w_enc
            pl.BlockSpec((1, n_hid), lambda i: (0, 0)),         # b_enc
            pl.BlockSpec((n_hid, n_vis), lambda i: (0, 0)),     # w_dec
            pl.BlockSpec((1, n_vis), lambda i: (0, 0)),         # b_dec
        ],
        out_specs=pl.BlockSpec((tb, n_vis), lambda i: (i, 0)),
        compiler_params=pltpu.CompilerParams(
            dimension_semantics=("parallel",),                  # v7x megacore
        ),
        cost_estimate=cost,
    )(x, w_enc, b_enc, w_dec, b_dec)

    if padded_b != B:
        out = out[:B]
    return out


def init_params(key, n_vis, n_hid):
    """Parameter init mirroring PyTorch nn.Linear defaults.

    nn.Linear: weight, bias ~ U(-1/sqrt(fan_in), 1/sqrt(fan_in)).
    Weights are returned transposed to (in_features, out_features).
    """
    k = jax.random.split(key, 4)
    bound_enc = 1.0 / math.sqrt(n_vis)
    bound_dec = 1.0 / math.sqrt(n_hid)

    w_enc = jax.random.uniform(k[0], (n_vis, n_hid), jnp.float32,
                               -bound_enc, bound_enc)
    b_enc = jax.random.uniform(k[1], (1, n_hid), jnp.float32,
                               -bound_enc, bound_enc)
    w_dec = jax.random.uniform(k[2], (n_hid, n_vis), jnp.float32,
                               -bound_dec, bound_dec)
    b_dec = jax.random.uniform(k[3], (1, n_vis), jnp.float32,
                               -bound_dec, bound_dec)
    return w_enc, b_enc, w_dec, b_dec


def autoencoder_forward_ref(x, params):
    """Pure-JAX reference for correctness checking."""
    w_enc, b_enc, w_dec, b_dec = params
    h = jnp.maximum(x @ w_enc + b_enc, 0.0)
    return jax.nn.sigmoid(h @ w_dec + b_dec)


# TODO(synk): optimizer construction / recon_loss / train_step are training-side
# state and gradients; only the forward pass is implemented as a kernel.


if __name__ == "__main__":
    # conf.n_vis = 128, conf.n_hid = 32, batch = 8 (small synthetic shapes).
    B, n_vis, n_hid = 8, 128, 32

    key = jax.random.PRNGKey(0)
    k_param, k_x = jax.random.split(key, 2)

    params = init_params(k_param, n_vis, n_hid)
    x = jax.random.uniform(k_x, (B, n_vis), jnp.float32)

    out = autoencoder_forward(x, params)       # f32 matmuls -> tight tolerance
    out = jax.block_until_ready(out)

    ref = autoencoder_forward_ref(x, params)
    assert out.shape == (B, n_vis)
    assert jnp.allclose(out, ref, atol=1e-5, rtol=1e-5), "mismatch vs reference"

    print("KERNEL_OK")
</pallas_src>

<mosaic_0001>
module attributes {stable_mosaic.version = 11 : i64} {
  func.func @ae_forward_kernel(%arg0: i32, %arg1: memref<8x128xf32, #tpu.memory_space<vmem>>, %arg2: memref<128x32xf32, #tpu.memory_space<vmem>>, %arg3: memref<1x32xf32, #tpu.memory_space<vmem>>, %arg4: memref<32x128xf32, #tpu.memory_space<vmem>>, %arg5: memref<1x128xf32, #tpu.memory_space<vmem>>, %arg6: memref<8x128xf32, #tpu.memory_space<vmem>>) attributes {dimension_semantics = [#tpu.dimension_semantics<parallel>], iteration_bounds = array<i64: 1>, scalar_prefetch = 0 : i64, scratch_operands = 0 : i64, tpu.core_type = #tpu.core_type<tc>, window_params = [{transform_indices = @transform_0, window_bounds = array<i64: 8, 128>}, {pipeline_mode = #tpu.pipeline_mode<synchronous>, transform_indices = @transform_1, window_bounds = array<i64: 128, 32>}, {pipeline_mode = #tpu.pipeline_mode<synchronous>, transform_indices = @transform_2, window_bounds = array<i64: 1, 32>}, {pipeline_mode = #tpu.pipeline_mode<synchronous>, transform_indices = @transform_3, window_bounds = array<i64: 32, 128>}, {pipeline_mode = #tpu.pipeline_mode<synchronous>, transform_indices = @transform_4, window_bounds = array<i64: 1, 128>}, {transform_indices = @transform_5, window_bounds = array<i64: 8, 128>}]} {
    %c0 = arith.constant 0 : index
    %c0_0 = arith.constant 0 : index
    %0 = vector.load %arg1[%c0, %c0_0] : memref<8x128xf32, #tpu.memory_space<vmem>>, vector<8x128xf32>
    %c0_1 = arith.constant 0 : index
    %c0_2 = arith.constant 0 : index
    %1 = vector.load %arg2[%c0_1, %c0_2] : memref<128x32xf32, #tpu.memory_space<vmem>>, vector<128x32xf32>
    %cst = arith.constant dense<0.000000e+00> : vector<8x32xf32>
    %2 = tpu.matmul %0, %1, %cst {dimension_numbers = #tpu.dot_dimension_numbers<[1], [0], [0], [1], [0, 0, 1, 1], [], []>} : vector<8x128xf32>, vector<128x32xf32>, vector<8x32xf32> -> vector<8x32xf32>
    %c0_3 = arith.constant 0 : index
    %c0_4 = arith.constant 0 : index
    %3 = vector.load %arg3[%c0_3, %c0_4] : memref<1x32xf32, #tpu.memory_space<vmem>>, vector<1x32xf32>
    %4 = vector.broadcast %3 : vector<1x32xf32> to vector<8x32xf32>
    %5 = arith.addf %2, %4 : vector<8x32xf32>
    %cst_5 = arith.constant 0.000000e+00 : f32
    %6 = vector.broadcast %cst_5 : f32 to vector<8x32xf32>
    %7 = arith.maximumf %5, %6 : vector<8x32xf32>
    %c0_6 = arith.constant 0 : index
    %c0_7 = arith.constant 0 : index
    %8 = vector.load %arg4[%c0_6, %c0_7] : memref<32x128xf32, #tpu.memory_space<vmem>>, vector<32x128xf32>
    %cst_8 = arith.constant dense<0.000000e+00> : vector<8x128xf32>
    %9 = tpu.matmul %7, %8, %cst_8 {dimension_numbers = #tpu.dot_dimension_numbers<[1], [0], [0], [1], [0, 0, 1, 1], [], []>} : vector<8x32xf32>, vector<32x128xf32>, vector<8x128xf32> -> vector<8x128xf32>
    %c0_9 = arith.constant 0 : index
    %c0_10 = arith.constant 0 : index
    %10 = vector.load %arg5[%c0_9, %c0_10] : memref<1x128xf32, #tpu.memory_space<vmem>>, vector<1x128xf32>
    %11 = vector.broadcast %10 : vector<1x128xf32> to vector<8x128xf32>
    %12 = arith.addf %9, %11 : vector<8x128xf32>
    %13 = arith.negf %12 : vector<8x128xf32>
    %14 = math.exp %13 : vector<8x128xf32>
    %cst_11 = arith.constant 1.000000e+00 : f32
    %15 = vector.broadcast %cst_11 : f32 to vector<8x128xf32>
    %16 = arith.addf %15, %14 : vector<8x128xf32>
    %17 = arith.divf %15, %16 : vector<8x128xf32>
    %c0_12 = arith.constant 0 : index
    %c0_13 = arith.constant 0 : index
    %18 = vector.load %arg6[%c0_12, %c0_13] : memref<8x128xf32, #tpu.memory_space<vmem>>, vector<8x128xf32>
    tpu.vector_store %arg6[%c0_12, %c0_13], %17 {strides = array<i32>} : memref<8x128xf32, #tpu.memory_space<vmem>>, vector<8x128xf32>,
    return
  }
  func.func @transform_0(%arg0: i32) -> (i32, i32) {
    %c0_i32 = arith.constant 0 : i32
    %c0_i32_0 = arith.constant 0 : i32
    return %arg0, %c0_i32 : i32, i32
  }
  func.func @transform_1(%arg0: i32) -> (i32, i32) {
    %c0_i32 = arith.constant 0 : i32
    %c0_i32_0 = arith.constant 0 : i32
    %c0_i32_1 = arith.constant 0 : i32
    return %c0_i32, %c0_i32_0 : i32, i32
  }
  func.func @transform_2(%arg0: i32) -> (i32, i32) {
    %c0_i32 = arith.constant 0 : i32
    %c0_i32_0 = arith.constant 0 : i32
    %c0_i32_1 = arith.constant 0 : i32
    return %c0_i32, %c0_i32_0 : i32, i32
  }
  func.func @transform_3(%arg0: i32) -> (i32, i32) {
    %c0_i32 = arith.constant 0 : i32
    %c0_i32_0 = arith.constant 0 : i32
    %c0_i32_1 = arith.constant 0 : i32
    return %c0_i32, %c0_i32_0 : i32, i32
  }
  func.func @transform_4(%arg0: i32) -> (i32, i32) {
    %c0_i32 = arith.constant 0 : i32
    %c0_i32_0 = arith.constant 0 : i32
    %c0_i32_1 = arith.constant 0 : i32
    return %c0_i32, %c0_i32_0 : i32, i32
  }
  func.func @transform_5(%arg0: i32) -> (i32, i32) {
    %c0_i32 = arith.constant 0 : i32
    %c0_i32_0 = arith.constant 0 : i32
    return %arg0, %c0_i32 : i32, i32
  }
}

</mosaic_0001>

<llo_original>
// kernel: tpu_custom_call.1
$region0: #{tpu_custom_call.1}
  #allocation0 [shape = 'u32[]', space=smem, size = 0x4, offset = 0x4, fixed_abs, tag = 'smem constant byte address 0x4 - core index']
  #allocation1 [shape = 'u32[144,128]{1,0:T(1,128)}', space=vmem, size = 0x12000, scoped, tag = 'internal scratch']
  %s0 = inlined_call_operand.vmem [shape: f32[8,128], index: 0, kind: input, shape index: {}]
  %s1 = inlined_call_operand.vmem [shape: f32[128,32], index: 1, kind: input, shape index: {}]
  %s2 = inlined_call_operand.vmem [shape: f32[1,32], index: 2, kind: input, shape index: {}]
  %s3 = inlined_call_operand.vmem [shape: f32[32,128], index: 3, kind: input, shape index: {}]
  %s4 = inlined_call_operand.vmem [shape: f32[1,128], index: 4, kind: input, shape index: {}]
  %s5 = inlined_call_operand.hbm [shape: f32[8,128], index: 5, kind: output, shape index: {}]
  %s6 = sld [smem:[#allocation0]]
  $region30: #{tpu_custom_call.1} parent=0
    _
  %s8 = ssub.s32 1, %s6
  %s9 = scalar_select 0, %s8, %s6
  $region1: #{tpu_custom_call.1} parent=0
    #allocation2 [shape = 'u8[4096]{0}', space=vmem, size = 0x1000, scoped, tag = 'output window, operand 0, single buffered']
    #allocation3 [shape = 's32[1]{0}', space=sflag, size = 0x4, scoped, tag = 'scoped memory for tpu_custom_call.1']
    %10 = vsyncpa [#allocation3], 0
    // Predicated region
    $region2: #{tpu_custom_call.1} parent=1 // pred_check
      _
    $region3: #{tpu_custom_call.1} parent=1 // pred_check_branch
      %12 = sbr.rel (0) target = $region5
    $region4: #{tpu_custom_call.1} parent=1 // pred_region
      _
    $region5: #{tpu_custom_call.1} parent=1 // pred_fallthru
      _
    // Predicated region
    $region6: #{tpu_custom_call.1} parent=1 // pred_check
      _
    $region7: #{tpu_custom_call.1} parent=1 // pred_check_branch
      %14 = sbr.rel (0) target = $region9
    $region8: #{tpu_custom_call.1} parent=1 // pred_region
      _
    $region9: #{tpu_custom_call.1} parent=1 // pred_fallthru
      _
    // Predicated region
    $region10: #{tpu_custom_call.1} parent=1 // pred_check
      _
    $region11: #{tpu_custom_call.1} parent=1 // pred_check_branch
      %16 = sbr.rel (0) target = $region13
    $region12: #{tpu_custom_call.1} parent=1 // pred_region
      _
    $region13: #{tpu_custom_call.1} parent=1 // pred_fallthru
      _
    // Predicated region
    $region14: #{tpu_custom_call.1} parent=1 // pred_check
      _
    $region15: #{tpu_custom_call.1} parent=1 // pred_check_branch
      %18 = sbr.rel (0) target = $region17
    $region16: #{tpu_custom_call.1} parent=1 // pred_region
      _
    $region17: #{tpu_custom_call.1} parent=1 // pred_fallthru
      _
    // Predicated region
    $region18: #{tpu_custom_call.1} parent=1 // pred_check
      _
    $region19: #{tpu_custom_call.1} parent=1 // pred_check_branch
      %20 = sbr.rel (0) target = $region21
    $region20: #{tpu_custom_call.1} parent=1 // pred_region
      _
    $region21: #{tpu_custom_call.1} parent=1 // pred_fallthru
      _
    %v21 = vld [vmem:[%s0] sm:$0xff]
    %v22 = vld [vmem:[%s1] sm:$0xff]
    %v23 = vld [vmem:[%s1 + $0x8] sm:$0xff]
    %v24 = vld [vmem:[%s1 + $0x10] sm:$0xff]
    %v25 = vld [vmem:[%s1 + $0x18] sm:$0xff]
    %v26 = vld [vmem:[%s1 + $0x20] sm:$0xff]
    %v27 = vld [vmem:[%s1 + $0x28] sm:$0xff]
    %v28 = vld [vmem:[%s1 + $0x30] sm:$0xff]
    %v29 = vld [vmem:[%s1 + $0x38] sm:$0xff]
    %v30 = vld [vmem:[%s1 + $0x40] sm:$0xff]
    %v31 = vld [vmem:[%s1 + $0x48] sm:$0xff]
    %v32 = vld [vmem:[%s1 + $0x50] sm:$0xff]
    %v33 = vld [vmem:[%s1 + $0x58] sm:$0xff]
    %v34 = vld [vmem:[%s1 + $0x60] sm:$0xff]
    %v35 = vld [vmem:[%s1 + $0x68] sm:$0xff]
    %v36 = vld [vmem:[%s1 + $0x70] sm:$0xff]
    %v37 = vld [vmem:[%s1 + $0x78] sm:$0xff]
    %v38 = vld [vmem:[%s2] sm:$0x1]
    %v40 = vlaneseq
    %v41 = vshrl.u32 %v40, 7
    %v42 = vsub.s32 0, %v41
    %v43 = vrot.slane %v38, %v42
    %45 = vmatprep.subr.mxu0 0.0
    %46 = vmatpush1.msra.mxu0 %v22
    %47 = vmatprep.subr.mxu0 0.0
    %48 = vmatpush1.msra.mxu0 %v23
    %49 = vmatprep.subr.mxu0 0.0
    %50 = vmatpush1.msra.mxu0 %v24
    %51 = vmatprep.subr.mxu0 0.0
    %52 = vmatpush1.msra.mxu0 %v25
    %53 = vmatprep.subr.mxu0 0.0
    %54 = vmatpush1.msra.mxu0 %v26
    %55 = vmatprep.subr.mxu0 0.0
    %56 = vmatpush1.msra.mxu0 %v27
    %57 = vmatprep.subr.mxu0 0.0
    %58 = vmatpush1.msra.mxu0 %v28
    %59 = vmatprep.subr.mxu0 0.0
    %60 = vmatpush1.msra.mxu0 %v29
    %61 = vmatprep.subr.mxu0 0.0
    %62 = vmatpush1.msra.mxu0 %v30
    %63 = vmatprep.subr.mxu0 0.0
    %64 = vmatpush1.msra.mxu0 %v31
    %65 = vmatprep.subr.mxu0 0.0
    %66 = vmatpush1.msra.mxu0 %v32
    %67 = vmatprep.subr.mxu0 0.0
    %68 = vmatpush1.msra.mxu0 %v33
    %69 = vmatprep.subr.mxu0 0.0
    %70 = vmatpush1.msra.mxu0 %v34
    %71 = vmatprep.subr.mxu0 0.0
    %72 = vmatpush1.msra.mxu0 %v35
    %73 = vmatprep.subr.mxu0 0.0
    %74 = vmatpush1.msra.mxu0 %v36
    %75 = vmatprep.subr.mxu0 0.0
    %76 = vmatpush1.msra.mxu0 %v37
    %77 = vmatprep.subr.mxu0 0.0
    %78 = vmatpush1.msra.mxu0 0.0
    %79 = vmatprep.subr.mxu0 0.0
    %80 = vmatpush1.msra.mxu0 0.0
    %81 = vmatprep.subr.mxu0 0.0
    %82 = vmatpush1.msra.mxu0 0.0
    %83 = vmatprep.subr.mxu0 0.0
    %84 = vmatpush1.msra.mxu0 0.0
    %85 = vmatprep.subr.mxu0 0.0
    %86 = vmatpush1.msra.mxu0 0.0
    %87 = vmatprep.subr.mxu0 0.0
    %88 = vmatpush1.msra.mxu0 0.0
    %89 = vmatprep.subr.mxu0 0.0
    %90 = vmatpush1.msra.mxu0 0.0
    %91 = vmatprep.subr.mxu0 0.0
    %92 = vmatpush1.msra.mxu0 0.0
    %93 = vmatprep.subr.mxu0 0.0
    %94 = vmatpush1.msra.mxu0 0.0
    %95 = vmatprep.subr.mxu0 0.0
    %96 = vmatpush1.msra.mxu0 0.0
    %97 = vmatprep.subr.mxu0 0.0
    %98 = vmatpush1.msra.mxu0 0.0
    %99 = vmatprep.subr.mxu0 0.0
    %100 = vmatpush1.msra.mxu0 0.0
    %101 = vmatprep.subr.mxu0 0.0
    %102 = vmatpush1.msra.mxu0 0.0
    %103 = vmatprep.subr.mxu0 0.0
    %104 = vmatpush1.msra.mxu0 0.0
    %105 = vmatprep.subr.mxu0 0.0
    %106 = vmatpush1.msra.mxu0 0.0
    %107 = vmatprep.subr.mxu0 0.0
    %108 = vmatpush1.msra.mxu0 0.0
    %109 = vmatprep.mubr.f32.mxu0 0.0
    %110 = vmatmul.mubr.f32.gmra.mrb[0].mxu0 %v21
    %v111 = vpop.f32.mrb[0].mxu0
    %v112 = vadd.f32 %v43, %v111
    %v113 = vpop.f32.mrb[0].mxu0
    %114 = vdwg.mxu0
    %v115 = vmax.f32 %v112, 0.0
    %v116 = vld [vmem:[%s3] sm:$0xff]
    %v117 = vld [vmem:[%s3 + $0x8] sm:$0xff]
    %v118 = vld [vmem:[%s3 + $0x10] sm:$0xff]
    %v119 = vld [vmem:[%s3 + $0x18] sm:$0xff]
    %v120 = vld [vmem:[%s4] sm:$0x1]
    %v122 = vlaneseq
    %v123 = vshrl.u32 %v122, 7
    %v124 = vsub.s32 0, %v123
    %v125 = vrot.slane %v120, %v124
    %vm127 = vcmask 261120
    %v129 = vsel %vm127, %v115, 0
    %131 = vmatprep.subr.mxu0 0.0
    %132 = vmatpush1.msra.mxu0 %v116
    %133 = vmatprep.subr.mxu0 0.0
    %134 = vmatpush1.msra.mxu0 %v117
    %135 = vmatprep.subr.mxu0 0.0
    %136 = vmatpush1.msra.mxu0 %v118
    %137 = vmatprep.subr.mxu0 0.0
    %138 = vmatpush1.msra.mxu0 %v119
    %139 = vmatprep.subr.mxu0 0.0
    %140 = vmatpush1.msra.mxu0 0.0
    %141 = vmatprep.subr.mxu0 0.0
    %142 = vmatpush1.msra.mxu0 0.0
    %143 = vmatprep.subr.mxu0 0.0
    %144 = vmatpush1.msra.mxu0 0.0
    %145 = vmatprep.subr.mxu0 0.0
    %146 = vmatpush1.msra.mxu0 0.0
    %147 = vmatprep.subr.mxu0 0.0
    %148 = vmatpush1.msra.mxu0 0.0
    %149 = vmatprep.subr.mxu0 0.0
    %150 = vmatpush1.msra.mxu0 0.0
    %151 = vmatprep.subr.mxu0 0.0
    %152 = vmatpush1.msra.mxu0 0.0
    %153 = vmatprep.subr.mxu0 0.0
    %154 = vmatpush1.msra.mxu0 0.0
    %155 = vmatprep.subr.mxu0 0.0
    %156 = vmatpush1.msra.mxu0 0.0
    %157 = vmatprep.subr.mxu0 0.0
    %158 = vmatpush1.msra.mxu0 0.0
    %159 = vmatprep.subr.mxu0 0.0
    %160 = vmatpush1.msra.mxu0 0.0
    %161 = vmatprep.subr.mxu0 0.0
    %162 = vmatpush1.msra.mxu0 0.0
    %163 = vmatprep.subr.mxu0 0.0
    %164 = vmatpush1.msra.mxu0 0.0
    %165 = vmatprep.subr.mxu0 0.0
    %166 = vmatpush1.msra.mxu0 0.0
    %167 = vmatprep.subr.mxu0 0.0
    %168 = vmatpush1.msra.mxu0 0.0
    %169 = vmatprep.subr.mxu0 0.0
    %170 = vmatpush1.msra.mxu0 0.0
    %171 = vmatprep.subr.mxu0 0.0
    %172 = vmatpush1.msra.mxu0 0.0
    %173 = vmatprep.subr.mxu0 0.0
    %174 = vmatpush1.msra.mxu0 0.0
    %175 = vmatprep.subr.mxu0 0.0
    %176 = vmatpush1.msra.mxu0 0.0
    %177 = vmatprep.subr.mxu0 0.0
    %178 = vmatpush1.msra.mxu0 0.0
    %179 = vmatprep.subr.mxu0 0.0
    %180 = vmatpush1.msra.mxu0 0.0
    %181 = vmatprep.subr.mxu0 0.0
    %182 = vmatpush1.msra.mxu0 0.0
    %183 = vmatprep.subr.mxu0 0.0
    %184 = vmatpush1.msra.mxu0 0.0
    %185 = vmatprep.subr.mxu0 0.0
    %186 = vmatpush1.msra.mxu0 0.0
    %187 = vmatprep.subr.mxu0 0.0
    %188 = vmatpush1.msra.mxu0 0.0
    %189 = vmatprep.subr.mxu0 0.0
    %190 = vmatpush1.msra.mxu0 0.0
    %191 = vmatprep.subr.mxu0 0.0
    %192 = vmatpush1.msra.mxu0 0.0
    %193 = vmatprep.subr.mxu0 0.0
    %194 = vmatpush1.msra.mxu0 0.0
    %195 = vmatprep.mubr.f32.mxu0 0.0
    %196 = vmatmul.mubr.f32.gmra.mrb[0].mxu0 %v129
    %v197 = vpop.f32.mrb[0].mxu0
    %v198 = vadd.f32 %v125, %v197
    %v199 = vpop.f32.mrb[0].mxu0
    %200 = vdwg.mxu0
    %v201 = vxor.u32 %v198, 2147483648
    %v202 = vmul.f32 %v201, 1.442695
    %v203 = vpow.pop %v202
    %v204 = vadd.f32 %v203, 1.0
    %v205 = vrcp.pop %v204
    %v206 = vmul.f32 1.0, %v205
    %207 = vst [vmem:[#allocation2] sm:$0xff] %v206
    // Predicated region
    $region22: #{tpu_custom_call.1} parent=1 // pred_check
      _
    $region23: #{tpu_custom_call.1} parent=1 // pred_check_branch
      %209 = sbr.rel (0) target = $region25
    $region24: #{tpu_custom_call.1} parent=1 // pred_region
      %s211 = ssub.s32 128, 128
      %212 = vsyncadd [#allocation3], %s211
      %s214 = sshll.u32 [#allocation2], 4
      %s215 = int_to_ptr.vmem [resolvable:$true] %s214
      %217 = dma.vmem_to_hbm [thread:$0]  %s215, 128, %s5, [#allocation3]
    $region25: #{tpu_custom_call.1} parent=1 // pred_fallthru
      _
    // Predicated region
    $region26: #{tpu_custom_call.1} parent=1 // pred_check
      _
    $region27: #{tpu_custom_call.1} parent=1 // pred_check_branch
      %219 = sbr.rel (0) target = $region29
    $region28: #{tpu_custom_call.1} parent=1 // pred_region
      %220 = dma.done [#allocation3], 128
    $region29: #{tpu_custom_call.1} parent=1 // pred_fallthru
      _
    %221 = vsyncpa [#allocation3], 1

</llo_original>
